<compile_context>
chip_gen: v7x
topology: tpu7x:2x2x1
jax: 0.10.0
libtpu: 0.0.40
codegen_flags: <defaults>
</compile_context>

<pallas_src>
import functools

import jax
import jax.numpy as jnp
from jax.experimental import pallas as pl
from jax.experimental.pallas import tpu as pltpu

_LANE = 128                        # TPU lane width (last-dim vreg extent)
_GRIDLESS_MAX_ROWS = 256           # above this, tile the batch (engages v7x dual-TC)
_TARGET_X_TILE_BYTES = 2 << 20     # ~2 MiB of activations per grid step
_VMEM_BUDGET = 32 << 20            # cap on the kernel's VMEM footprint


def _round_up(n, m):
    return ((n + m - 1) // m) * m


def _linear_kernel(x_ref, w_ref, b_ref, o_ref):
    """y = x @ W_t + b with W_t already in (In, OutP) layout.

    x_ref: (TB, In)     activations (f32 or bf16)
    w_ref: (In, OutP)   pre-transposed, lane-padded weight
    b_ref: (1, OutP)    bias, f32
    o_ref: (TB, OutP)   lane-dense f32 output
    """
    acc = jnp.dot(x_ref[...], w_ref[...], preferred_element_type=jnp.float32)
    o_ref[...] = (acc + b_ref[...]).astype(o_ref.dtype)


def prepare_params(weight, bias, compute_dtype=jnp.float32):
    """One-time parameter prep (hoisted out of the per-call hot path).

    PyTorch-layout weight (Out, In) -> (In, OutP) with OutP padded to a lane
    multiple; bias padded to OutP and kept in f32 (epilogue stays f32).
    Returns (w_t, b2d, out_features).
    """
    weight = jnp.asarray(weight)
    bias = jnp.asarray(bias)
    out_features, in_features = weight.shape
    out_p = _round_up(out_features, _LANE)
    w_t = weight.T                                  # (In, Out)
    b = bias
    if out_p != out_features:
        w_t = jnp.pad(w_t, ((0, 0), (0, out_p - out_features)))
        b = jnp.pad(b, (0, out_p - out_features))
    w_t = w_t.astype(compute_dtype)
    b2d = b.astype(jnp.float32).reshape(1, out_p)
    return w_t, b2d, int(out_features)


def _cost(B, In, OutP, x_itemsize, w_itemsize):
    return pl.CostEstimate(
        flops=2 * B * In * OutP,
        transcendentals=0,
        bytes_accessed=(B * In * x_itemsize + In * OutP * w_itemsize
                        + OutP * 4 + B * OutP * 4),
    )


@functools.partial(jax.jit, static_argnames=("out_features",))
def _forward_small(x, w_t, b2d, *, out_features):
    """Single VMEM-resident block: gridless call, no pipeline overhead."""
    B, In = x.shape
    OutP = w_t.shape[1]
    y = pl.pallas_call(
        _linear_kernel,
        out_shape=jax.ShapeDtypeStruct((B, OutP), jnp.float32),
        in_specs=[pl.BlockSpec(memory_space=pltpu.MemorySpace.VMEM)] * 3,
        out_specs=pl.BlockSpec(memory_space=pltpu.MemorySpace.VMEM),
        cost_estimate=_cost(B, In, OutP, x.dtype.itemsize, w_t.dtype.itemsize),
    )(x, w_t, b2d)
    return y if OutP == out_features else y[:, :out_features]


def _make_tiled_forward(single_buffer_params):
    @functools.partial(jax.jit, static_argnames=("out_features", "tb"))
    def fwd(x, w_t, b2d, *, out_features, tb):
        B, In = x.shape
        OutP = w_t.shape[1]
        nb = -(-B // tb)
        xi = x.dtype.itemsize
        wi = w_t.dtype.itemsize

        param_kw = {}
        param_copies = 2
        if single_buffer_params:
            # Grid-invariant operands: never re-DMA'd, so one buffer suffices.
            param_kw["pipeline_mode"] = pl.Buffered(1)
            param_copies = 1

        need = (2 * tb * In * xi                 # double-buffered x tiles
                + 2 * tb * OutP * 4              # double-buffered out tiles
                + param_copies * In * OutP * wi  # resident weight
                + param_copies * OutP * 4)       # resident bias
        vmem_limit = int(min(max(need + (8 << 20), 16 << 20), 48 << 20))

        y = pl.pallas_call(
            _linear_kernel,
            out_shape=jax.ShapeDtypeStruct((B, OutP), jnp.float32),
            grid=(nb,),
            in_specs=[
                pl.BlockSpec((tb, In), lambda i: (i, 0)),
                pl.BlockSpec((In, OutP), lambda i: (0, 0), **param_kw),  # resident
                pl.BlockSpec((1, OutP), lambda i: (0, 0), **param_kw),   # resident
            ],
            out_specs=pl.BlockSpec((tb, OutP), lambda i: (i, 0)),
            compiler_params=pltpu.CompilerParams(
                dimension_semantics=("parallel",),   # batch rows independent
                vmem_limit_bytes=vmem_limit,
            ),
            cost_estimate=_cost(B, In, OutP, xi, wi),
        )(x, w_t, b2d)
        return y if OutP == out_features else y[:, :out_features]

    return fwd


_tiled_safe = _make_tiled_forward(False)
_tiled_fast = _make_tiled_forward(True) if hasattr(pl, "Buffered") else None
_use_fast_tiled = _tiled_fast is not None


def _pick_batch_tile(B, In, OutP, x_itemsize, w_itemsize):
    """Bytes-sized batch tile: ~2 MiB of x per step, >=2 grid steps, VMEM-capped."""
    tb = _TARGET_X_TILE_BYTES // max(1, x_itemsize * In)
    tb = max(8, (tb // 8) * 8)
    tb = min(tb, _round_up(-(-B // 2), 8))   # >= 2 steps -> v7x megacore sharding
    tb = min(tb, _round_up(B, 8))

    def footprint(t):
        return (2 * t * In * x_itemsize + 2 * t * OutP * 4
                + 2 * In * OutP * w_itemsize + 2 * OutP * 4)

    while tb > 8 and footprint(tb) > _VMEM_BUDGET:
        tb = max(8, ((tb // 2) // 8) * 8)
    return int(tb)


def policy_network_forward(x, w_t, b2d, out_features):
    """PyTorch nn.Linear forward, y = x @ W^T + b, on pre-prepared params.

    x:   (B, In)       f32 or bf16 activations
    w_t: (In, OutP)    from prepare_params (transposed, lane-padded)
    b2d: (1, OutP)     f32 bias from prepare_params
    returns (B, out_features) f32
    """
    global _use_fast_tiled
    B, In = x.shape
    OutP = w_t.shape[1]

    if B <= _GRIDLESS_MAX_ROWS:
        return _forward_small(x, w_t, b2d, out_features=out_features)

    tb = _pick_batch_tile(B, In, OutP, x.dtype.itemsize, w_t.dtype.itemsize)
    if _use_fast_tiled:
        try:
            return _tiled_fast(x, w_t, b2d, out_features=out_features, tb=tb)
        except Exception:
            _use_fast_tiled = False   # Buffered(1) unsupported here; use default buffering
    return _tiled_safe(x, w_t, b2d, out_features=out_features, tb=tb)


if __name__ == "__main__":
    # Small shapes consistent with PolicyNetwork(input_size, output_size).
    batch, input_size, output_size = 2, 16, 4

    key = jax.random.PRNGKey(0)
    kx, kw, kb, kx2 = jax.random.split(key, 4)

    x = jax.random.normal(kx, (batch, input_size), dtype=jnp.float32)
    weight = jax.random.normal(kw, (output_size, input_size), dtype=jnp.float32) * 0.1
    bias = jax.random.normal(kb, (output_size,), dtype=jnp.float32) * 0.1

    # --- f32 path, gridless single block (exact vs reference) ---
    w_t, b2d, out_f = prepare_params(weight, bias)
    y = jax.block_until_ready(policy_network_forward(x, w_t, b2d, out_f))
    y_ref = x @ weight.T + bias
    assert y.shape == (batch, output_size)
    assert jnp.allclose(y, y_ref, atol=1e-5), "f32 gridless mismatch vs reference"

    # --- f32 path, tiled batch that does NOT divide the tile (exercises the
    #     masked partial final block and the resident weight/bias specs) ---
    big_b = 300
    xb = jax.random.normal(kx2, (big_b, input_size), dtype=jnp.float32)
    yb = jax.block_until_ready(policy_network_forward(xb, w_t, b2d, out_f))
    yb_ref = xb @ weight.T + bias
    assert yb.shape == (big_b, output_size)
    assert jnp.allclose(yb, yb_ref, atol=1e-4), "f32 tiled mismatch vs reference"

    # --- bf16 compute path (halves HBM bytes on this bandwidth-bound kernel);
    #     accumulation / bias add / output stay f32, so only input rounding. ---
    w_t16, b2d16, _ = prepare_params(weight, bias, compute_dtype=jnp.bfloat16)
    y16 = jax.block_until_ready(
        policy_network_forward(xb.astype(jnp.bfloat16), w_t16, b2d16, out_f))
    assert jnp.allclose(y16, yb_ref, atol=3e-2, rtol=3e-2), "bf16 path mismatch"

    print("KERNEL_OK")
</pallas_src>

<mosaic_0001>
module attributes {stable_mosaic.version = 11 : i64} {
  func.func @_linear_kernel(%arg0: memref<2x16xf32, #tpu.memory_space<vmem>>, %arg1: memref<16x128xf32, #tpu.memory_space<vmem>>, %arg2: memref<1x128xf32, #tpu.memory_space<vmem>>, %arg3: memref<2x128xf32, #tpu.memory_space<vmem>>) attributes {dimension_semantics = [], scalar_prefetch = 0 : i64, scratch_operands = 0 : i64, tpu.core_type = #tpu.core_type<tc>} {
    %c0 = arith.constant 0 : index
    %c0_0 = arith.constant 0 : index
    %0 = vector.load %arg0[%c0, %c0_0] : memref<2x16xf32, #tpu.memory_space<vmem>>, vector<2x16xf32>
    %c0_1 = arith.constant 0 : index
    %c0_2 = arith.constant 0 : index
    %1 = vector.load %arg1[%c0_1, %c0_2] : memref<16x128xf32, #tpu.memory_space<vmem>>, vector<16x128xf32>
    %cst = arith.constant dense<0.000000e+00> : vector<2x128xf32>
    %2 = tpu.matmul %0, %1, %cst {dimension_numbers = #tpu.dot_dimension_numbers<[1], [0], [0], [1], [0, 0, 1, 1], [], []>} : vector<2x16xf32>, vector<16x128xf32>, vector<2x128xf32> -> vector<2x128xf32>
    %c0_3 = arith.constant 0 : index
    %c0_4 = arith.constant 0 : index
    %3 = vector.load %arg2[%c0_3, %c0_4] : memref<1x128xf32, #tpu.memory_space<vmem>>, vector<1x128xf32>
    %4 = vector.broadcast %3 : vector<1x128xf32> to vector<2x128xf32>
    %5 = arith.addf %2, %4 : vector<2x128xf32>
    %c0_5 = arith.constant 0 : index
    %c0_6 = arith.constant 0 : index
    %6 = vector.load %arg3[%c0_5, %c0_6] : memref<2x128xf32, #tpu.memory_space<vmem>>, vector<2x128xf32>
    tpu.vector_store %arg3[%c0_5, %c0_6], %5 {strides = array<i32>} : memref<2x128xf32, #tpu.memory_space<vmem>>, vector<2x128xf32>,
    return
  }
}

</mosaic_0001>

<llo_original>
// kernel: _forward_small.1
$region0: #{_forward_small.1}
  #allocation0 [shape = 'u32[]', space=smem, size = 0x4, offset = 0x4, fixed_abs, tag = 'smem constant byte address 0x4 - core index']
  #allocation1 [shape = 'u32[144,128]{1,0:T(1,128)}', space=vmem, size = 0x12000, scoped, tag = 'internal scratch']
  %s0 = inlined_call_operand.hbm [shape: f32[2,16], index: 0, kind: input, shape index: {}]
  %s1 = inlined_call_operand.hbm [shape: f32[16,128], index: 1, kind: input, shape index: {}]
  %s2 = inlined_call_operand.vmem [shape: f32[1,128], index: 2, kind: input, shape index: {}]
  %s3 = inlined_call_operand.hbm [shape: f32[2,128], index: 3, kind: output, shape index: {}]
  %s4 = sld [smem:[#allocation0]]
  $region30: #{_forward_small.1} parent=0
    _
  %s6 = ssub.s32 1, %s4
  %s7 = scalar_select 0, %s6, %s4
  $region1: #{_forward_small.1} parent=0
    #allocation2 [shape = 'u8[1024]{0}', space=vmem, size = 0x400, scoped, tag = 'input window, operand 0, single buffered']
    #allocation3 [shape = 's32[1]{0}', space=sflag, size = 0x4, scoped, tag = 'scoped memory for _forward_small.1']
    #allocation4 [shape = 's32[1]{0}', space=sflag, size = 0x4, scoped, tag = 'scoped memory for _forward_small.1']
    #allocation5 [shape = 'u8[8192]{0}', space=vmem, size = 0x2000, scoped, tag = 'input window, operand 1, single buffered']
    #allocation6 [shape = 's32[1]{0}', space=sflag, size = 0x4, scoped, tag = 'scoped memory for _forward_small.1']
    #allocation7 [shape = 'u8[1024]{0}', space=vmem, size = 0x400, scoped, tag = 'output window, operand 0, single buffered']
    %8 = vsyncpa [#allocation3], 0
    %9 = vsyncpa [#allocation6], 0
    %10 = vsyncpa [#allocation4], 0
    // Predicated region
    $region2: #{_forward_small.1} parent=1 // pred_check
      _
    $region3: #{_forward_small.1} parent=1 // pred_check_branch
      %12 = sbr.rel (0) target = $region5
    $region4: #{_forward_small.1} parent=1 // pred_region
      %s14 = ssub.s32 32, 32
      %15 = vsyncadd [#allocation3], %s14
      %s17 = sshll.u32 [#allocation2], 4
      %s18 = int_to_ptr.vmem [resolvable:$true] %s17
      %20 = dma.hbm_to_vmem [thread:$0]  %s0, 32, %s18, [#allocation3]
    $region5: #{_forward_small.1} parent=1 // pred_fallthru
      _
    // Predicated region
    $region6: #{_forward_small.1} parent=1 // pred_check
      _
    $region7: #{_forward_small.1} parent=1 // pred_check_branch
      %22 = sbr.rel (0) target = $region9
    $region8: #{_forward_small.1} parent=1 // pred_region
      %s24 = ssub.s32 256, 256
      %25 = vsyncadd [#allocation6], %s24
      %s26 = sshll.u32 [#allocation5], 4
      %s27 = int_to_ptr.vmem [resolvable:$true] %s26
      %32 = dma.hbm_to_vmem [thread:$0]  %s1, 256, %s27, [#allocation6], 128, 128, 8
    $region9: #{_forward_small.1} parent=1 // pred_fallthru
      _
    // Predicated region
    $region10: #{_forward_small.1} parent=1 // pred_check
      _
    $region11: #{_forward_small.1} parent=1 // pred_check_branch
      %34 = sbr.rel (0) target = $region13
    $region12: #{_forward_small.1} parent=1 // pred_region
      _
    $region13: #{_forward_small.1} parent=1 // pred_fallthru
      _
    // Predicated region
    $region14: #{_forward_small.1} parent=1 // pred_check
      _
    $region15: #{_forward_small.1} parent=1 // pred_check_branch
      %36 = sbr.rel (0) target = $region17
    $region16: #{_forward_small.1} parent=1 // pred_region
      %37 = dma.done [#allocation3], 32
    $region17: #{_forward_small.1} parent=1 // pred_fallthru
      _
    // Predicated region
    $region18: #{_forward_small.1} parent=1 // pred_check
      _
    $region19: #{_forward_small.1} parent=1 // pred_check_branch
      %39 = sbr.rel (0) target = $region21
    $region20: #{_forward_small.1} parent=1 // pred_region
      %40 = dma.done [#allocation6], 256
    $region21: #{_forward_small.1} parent=1 // pred_fallthru
      _
    %v41 = vld [vmem:[#allocation2] sm:$0x3]
    %v42 = vld [vmem:[#allocation5] sm:$0xff]
    %v43 = vld [vmem:[#allocation5 + $0x8] sm:$0xff]
    %v44 = vld [vmem:[%s2] sm:$0x1]
    %v46 = vlaneseq
    %v47 = vshrl.u32 %v46, 7
    %v48 = vsub.s32 0, %v47
    %v49 = vrot.slane %v44, %v48
    %vm51 = vcmask 130048
    %v53 = vsel %vm51, %v41, 0
    %55 = vmatprep.subr.mxu0 0.0
    %56 = vmatpush1.msra.mxu0 %v42
    %57 = vmatprep.subr.mxu0 0.0
    %58 = vmatpush1.msra.mxu0 %v43
    %59 = vmatprep.subr.mxu0 0.0
    %60 = vmatpush1.msra.mxu0 0.0
    %61 = vmatprep.subr.mxu0 0.0
    %62 = vmatpush1.msra.mxu0 0.0
    %63 = vmatprep.subr.mxu0 0.0
    %64 = vmatpush1.msra.mxu0 0.0
    %65 = vmatprep.subr.mxu0 0.0
    %66 = vmatpush1.msra.mxu0 0.0
    %67 = vmatprep.subr.mxu0 0.0
    %68 = vmatpush1.msra.mxu0 0.0
    %69 = vmatprep.subr.mxu0 0.0
    %70 = vmatpush1.msra.mxu0 0.0
    %71 = vmatprep.subr.mxu0 0.0
    %72 = vmatpush1.msra.mxu0 0.0
    %73 = vmatprep.subr.mxu0 0.0
    %74 = vmatpush1.msra.mxu0 0.0
    %75 = vmatprep.subr.mxu0 0.0
    %76 = vmatpush1.msra.mxu0 0.0
    %77 = vmatprep.subr.mxu0 0.0
    %78 = vmatpush1.msra.mxu0 0.0
    %79 = vmatprep.subr.mxu0 0.0
    %80 = vmatpush1.msra.mxu0 0.0
    %81 = vmatprep.subr.mxu0 0.0
    %82 = vmatpush1.msra.mxu0 0.0
    %83 = vmatprep.subr.mxu0 0.0
    %84 = vmatpush1.msra.mxu0 0.0
    %85 = vmatprep.subr.mxu0 0.0
    %86 = vmatpush1.msra.mxu0 0.0
    %87 = vmatprep.subr.mxu0 0.0
    %88 = vmatpush1.msra.mxu0 0.0
    %89 = vmatprep.subr.mxu0 0.0
    %90 = vmatpush1.msra.mxu0 0.0
    %91 = vmatprep.subr.mxu0 0.0
    %92 = vmatpush1.msra.mxu0 0.0
    %93 = vmatprep.subr.mxu0 0.0
    %94 = vmatpush1.msra.mxu0 0.0
    %95 = vmatprep.subr.mxu0 0.0
    %96 = vmatpush1.msra.mxu0 0.0
    %97 = vmatprep.subr.mxu0 0.0
    %98 = vmatpush1.msra.mxu0 0.0
    %99 = vmatprep.subr.mxu0 0.0
    %100 = vmatpush1.msra.mxu0 0.0
    %101 = vmatprep.subr.mxu0 0.0
    %102 = vmatpush1.msra.mxu0 0.0
    %103 = vmatprep.subr.mxu0 0.0
    %104 = vmatpush1.msra.mxu0 0.0
    %105 = vmatprep.subr.mxu0 0.0
    %106 = vmatpush1.msra.mxu0 0.0
    %107 = vmatprep.subr.mxu0 0.0
    %108 = vmatpush1.msra.mxu0 0.0
    %109 = vmatprep.subr.mxu0 0.0
    %110 = vmatpush1.msra.mxu0 0.0
    %111 = vmatprep.subr.mxu0 0.0
    %112 = vmatpush1.msra.mxu0 0.0
    %113 = vmatprep.subr.mxu0 0.0
    %114 = vmatpush1.msra.mxu0 0.0
    %115 = vmatprep.subr.mxu0 0.0
    %116 = vmatpush1.msra.mxu0 0.0
    %117 = vmatprep.subr.mxu0 0.0
    %118 = vmatpush1.msra.mxu0 0.0
    %119 = vmatprep.mubr.f32.mxu0 0.0
    %120 = vmatmul.mubr.f32.gmra.mrb[0].mxu0 %v53
    %v121 = vpop.f32.mrb[0].mxu0
    %v122 = vadd.f32 %v49, %v121
    %v123 = vpop.f32.mrb[0].mxu0
    %124 = vdwg.mxu0
    %125 = vst [vmem:[#allocation7] sm:$0x3] %v122
    // Predicated region
    $region22: #{_forward_small.1} parent=1 // pred_check
      _
    $region23: #{_forward_small.1} parent=1 // pred_check_branch
      %127 = sbr.rel (0) target = $region25
    $region24: #{_forward_small.1} parent=1 // pred_region
      %s129 = ssub.s32 32, 32
      %130 = vsyncadd [#allocation4], %s129
      %s132 = sshll.u32 [#allocation7], 4
      %s133 = int_to_ptr.vmem [resolvable:$true] %s132
      %135 = dma.vmem_to_hbm [thread:$0]  %s133, 32, %s3, [#allocation4]
    $region25: #{_forward_small.1} parent=1 // pred_fallthru
      _
    // Predicated region
    $region26: #{_forward_small.1} parent=1 // pred_check
      _
    $region27: #{_forward_small.1} parent=1 // pred_check_branch
      %137 = sbr.rel (0) target = $region29
    $region28: #{_forward_small.1} parent=1 // pred_region
      %138 = dma.done [#allocation4], 32
    $region29: #{_forward_small.1} parent=1 // pred_fallthru
      _
    %139 = vsyncpa [#allocation3], 1
    %140 = vsyncpa [#allocation6], 1
    %141 = vsyncpa [#allocation4], 1

</llo_original>
